<compile_context>
chip_gen: v7x
topology: tpu7x:2x2x1
jax: 0.10.0
libtpu: 0.0.40
codegen_flags: <defaults>
</compile_context>

<pallas_src>
import functools

import jax
import jax.numpy as jnp
from jax import lax
from jax.experimental import pallas as pl
from jax.experimental.pallas import tpu as pltpu


# ----------------------------- Pallas kernel -------------------------------

def _mlp_kernel(x_ref, w1_ref, b1_ref, w2_ref, b2_ref, o_ref):
    # layout: x [TM, Din] f32, w1 [Din, H] bf16, b1 [1, H] f32,
    #         w2 [H, Dout] bf16, b2 [1, Dout] f32, o [TM, Dout]
    x = x_ref[...]

    # fc1 (MXU, bf16 inputs, f32 accumulation)
    h = jnp.dot(x.astype(w1_ref.dtype), w1_ref[...],
                preferred_element_type=jnp.float32)
    h = h + b1_ref[...]

    # exact GELU (erf form) in f32 — matches torch nn.GELU() default
    h = 0.5 * h * (1.0 + lax.erf(h * jnp.float32(0.7071067811865476)))

    # fc2 (MXU, bf16 inputs, f32 accumulation)
    y = jnp.dot(h.astype(w2_ref.dtype), w2_ref[...],
                preferred_element_type=jnp.float32)
    y = y + b2_ref[...]

    o_ref[...] = y.astype(o_ref.dtype)


# ------------------------------ wrapper -------------------------------------

def mlp_pallas(x, params, *, compute_dtype=jnp.bfloat16, tm=None):
    """Fused MLP forward. x: [..., Din] -> [..., Dout]."""
    orig_shape = x.shape
    din = orig_shape[-1]
    x2d = x.reshape(-1, din)
    M = x2d.shape[0]

    w1 = params["w1"].astype(compute_dtype)          # [Din, H]
    w2 = params["w2"].astype(compute_dtype)          # [H, Dout]
    H = w1.shape[1]
    dout = w2.shape[1]
    b1 = params["b1"].reshape(1, H).astype(jnp.float32)
    b2 = params["b2"].reshape(1, dout).astype(jnp.float32)

    # Pick a large row tile (amortizes ~0.35us/step), pad M up if needed.
    if tm is None:
        tm = 512 if M >= 512 else (256 if M >= 256 else 128)
    m_pad = pl.cdiv(M, tm) * tm
    if m_pad != M:
        x2d = jnp.pad(x2d, ((0, m_pad - M), (0, 0)))

    out = pl.pallas_call(
        _mlp_kernel,
        out_shape=jax.ShapeDtypeStruct((m_pad, dout), x.dtype),
        grid_spec=pltpu.PrefetchScalarGridSpec(
            num_scalar_prefetch=0,
            grid=(m_pad // tm,),
            in_specs=[
                pl.BlockSpec((tm, din), lambda i: (i, 0)),     # x tile
                pl.BlockSpec((din, H), lambda i: (0, 0)),      # w1 (resident)
                pl.BlockSpec((1, H), lambda i: (0, 0)),        # b1
                pl.BlockSpec((H, dout), lambda i: (0, 0)),     # w2 (resident)
                pl.BlockSpec((1, dout), lambda i: (0, 0)),     # b2
            ],
            out_specs=pl.BlockSpec((tm, dout), lambda i: (i, 0)),
        ),
        compiler_params=pltpu.CompilerParams(
            dimension_semantics=("parallel",)),
    )(x2d, w1, b1, w2, b2)

    if m_pad != M:
        out = out[:M]
    return out.reshape(*orig_shape[:-1], dout)


# ---------------------------------- main -------------------------------------

if __name__ == "__main__":
    # Lane-dense small config: Din = Dout = 128, hidden = 512, rows = 2*64 = 128.
    B, N = 2, 64
    in_features, hidden_features, out_features = 128, 512, 128

    key = jax.random.PRNGKey(0)
    k1, k2, k3, k4, kx = jax.random.split(key, 5)
    params = dict(
        w1=0.05 * jax.random.normal(k1, (in_features, hidden_features), jnp.float32),
        b1=0.01 * jax.random.normal(k2, (hidden_features,), jnp.float32),
        w2=0.05 * jax.random.normal(k3, (hidden_features, out_features), jnp.float32),
        b2=0.01 * jax.random.normal(k4, (out_features,), jnp.float32),
    )
    x = jax.random.normal(kx, (B, N, in_features), jnp.float32)

    fwd = jax.jit(functools.partial(mlp_pallas))
    out = fwd(x, params)
    out = jax.block_until_ready(out)

    # plain-JAX f32 reference for a sanity check (bf16-matmul tolerance)
    def ref(x, p):
        h = x @ p["w1"] + p["b1"]
        h = 0.5 * h * (1.0 + lax.erf(h * jnp.float32(0.7071067811865476)))
        return h @ p["w2"] + p["b2"]

    r = ref(x, params)
    assert out.shape == (B, N, out_features), out.shape
    assert bool(jnp.all(jnp.isfinite(out)))
    err = float(jnp.max(jnp.abs(out - r)))
    assert err < 1e-1, err
    print("KERNEL_OK")
</pallas_src>

<mosaic_0001>
module attributes {stable_mosaic.version = 11 : i64} {
  func.func @_mlp_kernel(%arg0: i32, %arg1: memref<128x128xf32, #tpu.memory_space<vmem>>, %arg2: memref<128x512xbf16, #tpu.memory_space<vmem>>, %arg3: memref<1x512xf32, #tpu.memory_space<vmem>>, %arg4: memref<512x128xbf16, #tpu.memory_space<vmem>>, %arg5: memref<1x128xf32, #tpu.memory_space<vmem>>, %arg6: memref<128x128xf32, #tpu.memory_space<vmem>>) attributes {dimension_semantics = [#tpu.dimension_semantics<parallel>], iteration_bounds = array<i64: 1>, scalar_prefetch = 0 : i64, scratch_operands = 0 : i64, tpu.core_type = #tpu.core_type<tc>, window_params = [{transform_indices = @transform_0, window_bounds = array<i64: 128, 128>}, {pipeline_mode = #tpu.pipeline_mode<synchronous>, transform_indices = @transform_1, window_bounds = array<i64: 128, 512>}, {pipeline_mode = #tpu.pipeline_mode<synchronous>, transform_indices = @transform_2, window_bounds = array<i64: 1, 512>}, {pipeline_mode = #tpu.pipeline_mode<synchronous>, transform_indices = @transform_3, window_bounds = array<i64: 512, 128>}, {pipeline_mode = #tpu.pipeline_mode<synchronous>, transform_indices = @transform_4, window_bounds = array<i64: 1, 128>}, {transform_indices = @transform_5, window_bounds = array<i64: 128, 128>}]} {
    %c0 = arith.constant 0 : index
    %c0_0 = arith.constant 0 : index
    %0 = vector.load %arg1[%c0, %c0_0] : memref<128x128xf32, #tpu.memory_space<vmem>>, vector<128x128xf32>
    %1 = arith.truncf %0 : vector<128x128xf32> to vector<128x128xbf16>
    %c0_1 = arith.constant 0 : index
    %c0_2 = arith.constant 0 : index
    %2 = vector.load %arg2[%c0_1, %c0_2] : memref<128x512xbf16, #tpu.memory_space<vmem>>, vector<128x512xbf16>
    %cst = arith.constant dense<0.000000e+00> : vector<128x512xf32>
    %3 = tpu.matmul %1, %2, %cst {dimension_numbers = #tpu.dot_dimension_numbers<[1], [0], [0], [1], [0, 0, 1, 1], [], []>} : vector<128x128xbf16>, vector<128x512xbf16>, vector<128x512xf32> -> vector<128x512xf32>
    %c0_3 = arith.constant 0 : index
    %c0_4 = arith.constant 0 : index
    %4 = vector.load %arg3[%c0_3, %c0_4] : memref<1x512xf32, #tpu.memory_space<vmem>>, vector<1x512xf32>
    %5 = vector.broadcast %4 : vector<1x512xf32> to vector<128x512xf32>
    %6 = arith.addf %3, %5 : vector<128x512xf32>
    %cst_5 = arith.constant 5.000000e-01 : f32
    %7 = vector.broadcast %cst_5 : f32 to vector<128x512xf32>
    %8 = arith.mulf %7, %6 : vector<128x512xf32>
    %cst_6 = arith.constant 0.707106769 : f32
    %9 = vector.broadcast %cst_6 : f32 to vector<128x512xf32>
    %10 = arith.mulf %6, %9 : vector<128x512xf32>
    %11 = math.erf %10 : vector<128x512xf32>
    %cst_7 = arith.constant 1.000000e+00 : f32
    %12 = vector.broadcast %cst_7 : f32 to vector<128x512xf32>
    %13 = arith.addf %12, %11 : vector<128x512xf32>
    %14 = arith.mulf %8, %13 : vector<128x512xf32>
    %15 = arith.truncf %14 : vector<128x512xf32> to vector<128x512xbf16>
    %c0_8 = arith.constant 0 : index
    %c0_9 = arith.constant 0 : index
    %16 = vector.load %arg4[%c0_8, %c0_9] : memref<512x128xbf16, #tpu.memory_space<vmem>>, vector<512x128xbf16>
    %cst_10 = arith.constant dense<0.000000e+00> : vector<128x128xf32>
    %17 = tpu.matmul %15, %16, %cst_10 {dimension_numbers = #tpu.dot_dimension_numbers<[1], [0], [0], [1], [0, 0, 1, 1], [], []>} : vector<128x512xbf16>, vector<512x128xbf16>, vector<128x128xf32> -> vector<128x128xf32>
    %c0_11 = arith.constant 0 : index
    %c0_12 = arith.constant 0 : index
    %18 = vector.load %arg5[%c0_11, %c0_12] : memref<1x128xf32, #tpu.memory_space<vmem>>, vector<1x128xf32>
    %19 = vector.broadcast %18 : vector<1x128xf32> to vector<128x128xf32>
    %20 = arith.addf %17, %19 : vector<128x128xf32>
    %c0_13 = arith.constant 0 : index
    %c0_14 = arith.constant 0 : index
    %21 = vector.load %arg6[%c0_13, %c0_14] : memref<128x128xf32, #tpu.memory_space<vmem>>, vector<128x128xf32>
    tpu.vector_store %arg6[%c0_13, %c0_14], %20 {strides = array<i32>} : memref<128x128xf32, #tpu.memory_space<vmem>>, vector<128x128xf32>,
    return
  }
  func.func @transform_0(%arg0: i32) -> (i32, i32) {
    %c0_i32 = arith.constant 0 : i32
    %c0_i32_0 = arith.constant 0 : i32
    return %arg0, %c0_i32 : i32, i32
  }
  func.func @transform_1(%arg0: i32) -> (i32, i32) {
    %c0_i32 = arith.constant 0 : i32
    %c0_i32_0 = arith.constant 0 : i32
    %c0_i32_1 = arith.constant 0 : i32
    return %c0_i32, %c0_i32_0 : i32, i32
  }
  func.func @transform_2(%arg0: i32) -> (i32, i32) {
    %c0_i32 = arith.constant 0 : i32
    %c0_i32_0 = arith.constant 0 : i32
    %c0_i32_1 = arith.constant 0 : i32
    return %c0_i32, %c0_i32_0 : i32, i32
  }
  func.func @transform_3(%arg0: i32) -> (i32, i32) {
    %c0_i32 = arith.constant 0 : i32
    %c0_i32_0 = arith.constant 0 : i32
    %c0_i32_1 = arith.constant 0 : i32
    return %c0_i32, %c0_i32_0 : i32, i32
  }
  func.func @transform_4(%arg0: i32) -> (i32, i32) {
    %c0_i32 = arith.constant 0 : i32
    %c0_i32_0 = arith.constant 0 : i32
    %c0_i32_1 = arith.constant 0 : i32
    return %c0_i32, %c0_i32_0 : i32, i32
  }
  func.func @transform_5(%arg0: i32) -> (i32, i32) {
    %c0_i32 = arith.constant 0 : i32
    %c0_i32_0 = arith.constant 0 : i32
    return %arg0, %c0_i32 : i32, i32
  }
}

</mosaic_0001>

<llo_original>
// kernel: mlp_pallas.1
$region0: #{mlp_pallas.1}
  #allocation0 [shape = 'u32[]', space=smem, size = 0x4, offset = 0x4, fixed_abs, tag = 'smem constant byte address 0x4 - core index']
  #allocation1 [shape = 'u32[144,128]{1,0:T(1,128)}', space=vmem, size = 0x12000, scoped, tag = 'internal scratch']
  %s0 = inlined_call_operand.vmem [shape: f32[128,128], index: 0, kind: input, shape index: {}]
  %s1 = inlined_call_operand.vmem [shape: bf16[128,512], index: 1, kind: input, shape index: {}]
  %s2 = inlined_call_operand.vmem [shape: f32[1,512], index: 2, kind: input, shape index: {}]
  %s3 = inlined_call_operand.vmem [shape: bf16[512,128], index: 3, kind: input, shape index: {}]
  %s4 = inlined_call_operand.vmem [shape: f32[1,128], index: 4, kind: input, shape index: {}]
  %s5 = inlined_call_operand.hbm [shape: f32[128,128], index: 5, kind: output, shape index: {}]
  %s6 = sld [smem:[#allocation0]]
  $region30: #{mlp_pallas.1} parent=0
    _
  %s8 = ssub.s32 1, %s6
  %s9 = scalar_select 0, %s8, %s6
  $region1: #{mlp_pallas.1} parent=0
    #allocation2 [shape = 'u8[65536]{0}', space=vmem, size = 0x10000, scoped, tag = 'output window, operand 0, single buffered']
    #allocation3 [shape = 's32[1]{0}', space=sflag, size = 0x4, scoped, tag = 'scoped memory for mlp_pallas.1']
    %10 = vsyncpa [#allocation3], 0
    // Predicated region
    $region2: #{mlp_pallas.1} parent=1 // pred_check
      _
    $region3: #{mlp_pallas.1} parent=1 // pred_check_branch
      %12 = sbr.rel (0) target = $region5
    $region4: #{mlp_pallas.1} parent=1 // pred_region
      _
    $region5: #{mlp_pallas.1} parent=1 // pred_fallthru
      _
    // Predicated region
    $region6: #{mlp_pallas.1} parent=1 // pred_check
      _
    $region7: #{mlp_pallas.1} parent=1 // pred_check_branch
      %14 = sbr.rel (0) target = $region9
    $region8: #{mlp_pallas.1} parent=1 // pred_region
      _
    $region9: #{mlp_pallas.1} parent=1 // pred_fallthru
      _
    // Predicated region
    $region10: #{mlp_pallas.1} parent=1 // pred_check
      _
    $region11: #{mlp_pallas.1} parent=1 // pred_check_branch
      %16 = sbr.rel (0) target = $region13
    $region12: #{mlp_pallas.1} parent=1 // pred_region
      _
    $region13: #{mlp_pallas.1} parent=1 // pred_fallthru
      _
    // Predicated region
    $region14: #{mlp_pallas.1} parent=1 // pred_check
      _
    $region15: #{mlp_pallas.1} parent=1 // pred_check_branch
      %18 = sbr.rel (0) target = $region17
    $region16: #{mlp_pallas.1} parent=1 // pred_region
      _
    $region17: #{mlp_pallas.1} parent=1 // pred_fallthru
      _
    // Predicated region
    $region18: #{mlp_pallas.1} parent=1 // pred_check
      _
    $region19: #{mlp_pallas.1} parent=1 // pred_check_branch
      %20 = sbr.rel (0) target = $region21
    $region20: #{mlp_pallas.1} parent=1 // pred_region
      _
    $region21: #{mlp_pallas.1} parent=1 // pred_fallthru
      _
    %v22 = vld [vmem:[%s0] sm:$0xff]
    %v23 = vld [vmem:[%s0 + $0x8] sm:$0xff]
    %v24 = vld [vmem:[%s0 + $0x10] sm:$0xff]
    %v25 = vld [vmem:[%s0 + $0x18] sm:$0xff]
    %v26 = vld [vmem:[%s0 + $0x20] sm:$0xff]
    %v27 = vld [vmem:[%s0 + $0x28] sm:$0xff]
    %v28 = vld [vmem:[%s0 + $0x30] sm:$0xff]
    %v29 = vld [vmem:[%s0 + $0x38] sm:$0xff]
    %v30 = vld [vmem:[%s0 + $0x40] sm:$0xff]
    %v31 = vld [vmem:[%s0 + $0x48] sm:$0xff]
    %v32 = vld [vmem:[%s0 + $0x50] sm:$0xff]
    %v33 = vld [vmem:[%s0 + $0x58] sm:$0xff]
    %v34 = vld [vmem:[%s0 + $0x60] sm:$0xff]
    %v35 = vld [vmem:[%s0 + $0x68] sm:$0xff]
    %v36 = vld [vmem:[%s0 + $0x70] sm:$0xff]
    %v37 = vld [vmem:[%s0 + $0x78] sm:$0xff]
    %v38 = vpack.c.bf16 %v23, %v22
    %v39 = vpack.c.bf16 %v25, %v24
    %v40 = vpack.c.bf16 %v27, %v26
    %v41 = vpack.c.bf16 %v29, %v28
    %v42 = vpack.c.bf16 %v31, %v30
    %v43 = vpack.c.bf16 %v33, %v32
    %v44 = vpack.c.bf16 %v35, %v34
    %v45 = vpack.c.bf16 %v37, %v36
    %v46 = vld [vmem:[%s1] sm:$0xff]
    %v47 = vld [vmem:[%s1 + $0x8] sm:$0xff]
    %v48 = vld [vmem:[%s1 + $0x10] sm:$0xff]
    %v49 = vld [vmem:[%s1 + $0x18] sm:$0xff]
    %v50 = vld [vmem:[%s1 + $0x20] sm:$0xff]
    %v51 = vld [vmem:[%s1 + $0x28] sm:$0xff]
    %v52 = vld [vmem:[%s1 + $0x30] sm:$0xff]
    %v53 = vld [vmem:[%s1 + $0x38] sm:$0xff]
    %v54 = vld [vmem:[%s1 + $0x40] sm:$0xff]
    %v55 = vld [vmem:[%s1 + $0x48] sm:$0xff]
    %v56 = vld [vmem:[%s1 + $0x50] sm:$0xff]
    %v57 = vld [vmem:[%s1 + $0x58] sm:$0xff]
    %v58 = vld [vmem:[%s1 + $0x60] sm:$0xff]
    %v59 = vld [vmem:[%s1 + $0x68] sm:$0xff]
    %v60 = vld [vmem:[%s1 + $0x70] sm:$0xff]
    %v61 = vld [vmem:[%s1 + $0x78] sm:$0xff]
    %v62 = vld [vmem:[%s1 + $0x80] sm:$0xff]
    %v63 = vld [vmem:[%s1 + $0x88] sm:$0xff]
    %v64 = vld [vmem:[%s1 + $0x90] sm:$0xff]
    %v65 = vld [vmem:[%s1 + $0x98] sm:$0xff]
    %v66 = vld [vmem:[%s1 + $0xa0] sm:$0xff]
    %v67 = vld [vmem:[%s1 + $0xa8] sm:$0xff]
    %v68 = vld [vmem:[%s1 + $0xb0] sm:$0xff]
    %v69 = vld [vmem:[%s1 + $0xb8] sm:$0xff]
    %v70 = vld [vmem:[%s1 + $0xc0] sm:$0xff]
    %v71 = vld [vmem:[%s1 + $0xc8] sm:$0xff]
    %v72 = vld [vmem:[%s1 + $0xd0] sm:$0xff]
    %v73 = vld [vmem:[%s1 + $0xd8] sm:$0xff]
    %v74 = vld [vmem:[%s1 + $0xe0] sm:$0xff]
    %v75 = vld [vmem:[%s1 + $0xe8] sm:$0xff]
    %v76 = vld [vmem:[%s1 + $0xf0] sm:$0xff]
    %v77 = vld [vmem:[%s1 + $0xf8] sm:$0xff]
    %v78 = vld [vmem:[%s2] sm:$0xf]
    %v80 = vlaneseq
    %v81 = vshrl.u32 %v80, 7
    %v82 = vsub.s32 0, %v81
    %v83 = vrot.slane %v78, %v82
    %v84 = vlaneseq
    %v85 = vshrl.u32 %v84, 7
    %v86 = vsub.s32 1, %v85
    %v87 = vrot.slane %v78, %v86
    %v88 = vlaneseq
    %v89 = vshrl.u32 %v88, 7
    %v90 = vsub.s32 2, %v89
    %v91 = vrot.slane %v78, %v90
    %v92 = vlaneseq
    %v93 = vshrl.u32 %v92, 7
    %v94 = vsub.s32 3, %v93
    %v95 = vrot.slane %v78, %v94
    %v132 = vunpack.c.l.b16 %v46
    %v133 = vunpack.c.h.b16 %v46
    %v134 = vunpack.c.l.b16 %v47
    %v135 = vunpack.c.h.b16 %v47
    %v136 = vunpack.c.l.b16 %v48
    %v137 = vunpack.c.h.b16 %v48
    %v138 = vunpack.c.l.b16 %v49
    %v139 = vunpack.c.h.b16 %v49
    %v140 = vunpack.c.l.b16 %v50
    %v141 = vunpack.c.h.b16 %v50
    %v142 = vunpack.c.l.b16 %v51
    %v143 = vunpack.c.h.b16 %v51
    %v144 = vunpack.c.l.b16 %v52
    %v145 = vunpack.c.h.b16 %v52
    %v146 = vunpack.c.l.b16 %v53
    %v147 = vunpack.c.h.b16 %v53
    %v148 = vunpack.c.l.b16 %v54
    %v149 = vunpack.c.h.b16 %v54
    %v150 = vunpack.c.l.b16 %v55
    %v151 = vunpack.c.h.b16 %v55
    %v152 = vunpack.c.l.b16 %v56
    %v153 = vunpack.c.h.b16 %v56
    %v154 = vunpack.c.l.b16 %v57
    %v155 = vunpack.c.h.b16 %v57
    %v156 = vunpack.c.l.b16 %v58
    %v157 = vunpack.c.h.b16 %v58
    %v158 = vunpack.c.l.b16 %v59
    %v159 = vunpack.c.h.b16 %v59
    %v160 = vunpack.c.l.b16 %v60
    %v161 = vunpack.c.h.b16 %v60
    %v162 = vunpack.c.l.b16 %v61
    %v163 = vunpack.c.h.b16 %v61
    %v164 = vunpack.c.l.b16 %v62
    %v165 = vunpack.c.h.b16 %v62
    %v166 = vunpack.c.l.b16 %v63
    %v167 = vunpack.c.h.b16 %v63
    %v168 = vunpack.c.l.b16 %v64
    %v169 = vunpack.c.h.b16 %v64
    %v170 = vunpack.c.l.b16 %v65
    %v171 = vunpack.c.h.b16 %v65
    %v172 = vunpack.c.l.b16 %v66
    %v173 = vunpack.c.h.b16 %v66
    %v174 = vunpack.c.l.b16 %v67
    %v175 = vunpack.c.h.b16 %v67
    %v176 = vunpack.c.l.b16 %v68
    %v177 = vunpack.c.h.b16 %v68
    %v178 = vunpack.c.l.b16 %v69
    %v179 = vunpack.c.h.b16 %v69
    %v180 = vunpack.c.l.b16 %v70
    %v181 = vunpack.c.h.b16 %v70
    %v182 = vunpack.c.l.b16 %v71
    %v183 = vunpack.c.h.b16 %v71
    %v184 = vunpack.c.l.b16 %v72
    %v185 = vunpack.c.h.b16 %v72
    %v186 = vunpack.c.l.b16 %v73
    %v187 = vunpack.c.h.b16 %v73
    %v188 = vunpack.c.l.b16 %v74
    %v189 = vunpack.c.h.b16 %v74
    %v190 = vunpack.c.l.b16 %v75
    %v191 = vunpack.c.h.b16 %v75
    %v192 = vunpack.c.l.b16 %v76
    %v193 = vunpack.c.h.b16 %v76
    %v194 = vunpack.c.l.b16 %v77
    %v195 = vunpack.c.h.b16 %v77
    %v196 = vpack.c.b16 %v136, %v132
    %v197 = vpack.c.b16 %v137, %v133
    %v198 = vpack.c.b16 %v138, %v134
    %v199 = vpack.c.b16 %v139, %v135
    %v200 = vpack.c.b16 %v144, %v140
    %v201 = vpack.c.b16 %v145, %v141
    %v202 = vpack.c.b16 %v146, %v142
    %v203 = vpack.c.b16 %v147, %v143
    %v204 = vpack.c.b16 %v152, %v148
    %v205 = vpack.c.b16 %v153, %v149
    %v206 = vpack.c.b16 %v154, %v150
    %v207 = vpack.c.b16 %v155, %v151
    %v208 = vpack.c.b16 %v160, %v156
    %v209 = vpack.c.b16 %v161, %v157
    %v210 = vpack.c.b16 %v162, %v158
    %v211 = vpack.c.b16 %v163, %v159
    %v212 = vpack.c.b16 %v168, %v164
    %v213 = vpack.c.b16 %v169, %v165
    %v214 = vpack.c.b16 %v170, %v166
    %v215 = vpack.c.b16 %v171, %v167
    %v216 = vpack.c.b16 %v176, %v172
    %v217 = vpack.c.b16 %v177, %v173
    %v218 = vpack.c.b16 %v178, %v174
    %v219 = vpack.c.b16 %v179, %v175
    %v220 = vpack.c.b16 %v184, %v180
    %v221 = vpack.c.b16 %v185, %v181
    %v222 = vpack.c.b16 %v186, %v182
    %v223 = vpack.c.b16 %v187, %v183
    %v224 = vpack.c.b16 %v192, %v188
    %v225 = vpack.c.b16 %v193, %v189
    %v226 = vpack.c.b16 %v194, %v190
    %v227 = vpack.c.b16 %v195, %v191
    %260 = vmatprep.subr.bf16.mxu0 %v197
    %261 = vmatpush1.bf16.msra.mxu0 %v196
    %262 = vmatprep.subr.bf16.mxu0 %v201
    %263 = vmatpush1.bf16.msra.mxu0 %v200
    %264 = vmatprep.subr.bf16.mxu0 %v205
    %265 = vmatpush1.bf16.msra.mxu0 %v204
    %266 = vmatprep.subr.bf16.mxu0 %v209
    %267 = vmatpush1.bf16.msra.mxu0 %v208
    %268 = vmatprep.subr.bf16.mxu0 %v213
    %269 = vmatpush1.bf16.msra.mxu0 %v212
    %270 = vmatprep.subr.bf16.mxu0 %v217
    %271 = vmatpush1.bf16.msra.mxu0 %v216
    %272 = vmatprep.subr.bf16.mxu0 %v221
    %273 = vmatpush1.bf16.msra.mxu0 %v220
    %274 = vmatprep.subr.bf16.mxu0 %v225
    %275 = vmatpush1.bf16.msra.mxu0 %v224
    %276 = vmatprep.subr.bf16.mxu0 0
    %277 = vmatpush1.bf16.msra.mxu0 0
    %278 = vmatprep.subr.bf16.mxu0 0
    %279 = vmatpush1.bf16.msra.mxu0 0
    %280 = vmatprep.subr.bf16.mxu0 0
    %281 = vmatpush1.bf16.msra.mxu0 0
    %282 = vmatprep.subr.bf16.mxu0 0
    %283 = vmatpush1.bf16.msra.mxu0 0
    %284 = vmatprep.subr.bf16.mxu0 0
    %285 = vmatpush1.bf16.msra.mxu0 0
    %286 = vmatprep.subr.bf16.mxu0 0
    %287 = vmatpush1.bf16.msra.mxu0 0
    %288 = vmatprep.subr.bf16.mxu0 0
    %289 = vmatpush1.bf16.msra.mxu0 0
    %290 = vmatprep.subr.bf16.mxu0 0
    %291 = vmatpush1.bf16.msra.mxu0 0
    %292 = vmatprep.mubr.bf16.mxu0 0
    %293 = vmatmul.mubr.bf16.gmra.mrb[0].mxu0 %v38
    %v294 = vpop.f32.mrb[0].mxu0
    %v295 = vadd.f32 %v83, %v294
    %v296 = vpop.f32.mrb[0].mxu0
    %v297 = vadd.f32 %v87, %v296
    %v298 = vpop.f32.mrb[0].mxu0
    %v299 = vadd.f32 %v83, %v298
    %v300 = vpop.f32.mrb[0].mxu0
    %v301 = vadd.f32 %v87, %v300
    %302 = vmatprep.mubr.bf16.mxu0 0
    %303 = vmatmul.mubr.bf16.gmra.mrb[0].mxu0 %v39
    %v304 = vpop.f32.mrb[0].mxu0
    %v305 = vadd.f32 %v83, %v304
    %v306 = vpop.f32.mrb[0].mxu0
    %v307 = vadd.f32 %v87, %v306
    %v308 = vpop.f32.mrb[0].mxu0
    %v309 = vadd.f32 %v83, %v308
    %v310 = vpop.f32.mrb[0].mxu0
    %v311 = vadd.f32 %v87, %v310
    %312 = vmatprep.mubr.bf16.mxu0 0
    %313 = vmatmul.mubr.bf16.gmra.mrb[0].mxu0 %v40
    %v314 = vpop.f32.mrb[0].mxu0
    %v315 = vadd.f32 %v83, %v314
    %v316 = vpop.f32.mrb[0].mxu0
    %v317 = vadd.f32 %v87, %v316
    %v318 = vpop.f32.mrb[0].mxu0
    %v319 = vadd.f32 %v83, %v318
    %v320 = vpop.f32.mrb[0].mxu0
    %v321 = vadd.f32 %v87, %v320
    %322 = vmatprep.mubr.bf16.mxu0 0
    %323 = vmatmul.mubr.bf16.gmra.mrb[0].mxu0 %v41
    %v324 = vpop.f32.mrb[0].mxu0
    %v325 = vadd.f32 %v83, %v324
    %v326 = vpop.f32.mrb[0].mxu0
    %v327 = vadd.f32 %v87, %v326
    %v328 = vpop.f32.mrb[0].mxu0
    %v329 = vadd.f32 %v83, %v328
    %v330 = vpop.f32.mrb[0].mxu0
    %v331 = vadd.f32 %v87, %v330
    %332 = vmatprep.mubr.bf16.mxu0 0
    %333 = vmatmul.mubr.bf16.gmra.mrb[0].mxu0 %v42
    %v334 = vpop.f32.mrb[0].mxu0
    %v335 = vadd.f32 %v83, %v334
    %v336 = vpop.f32.mrb[0].mxu0
    %v337 = vadd.f32 %v87, %v336
    %v338 = vpop.f32.mrb[0].mxu0
    %v339 = vadd.f32 %v83, %v338
    %v340 = vpop.f32.mrb[0].mxu0
    %v341 = vadd.f32 %v87, %v340
    %342 = vmatprep.mubr.bf16.mxu0 0
    %343 = vmatmul.mubr.bf16.gmra.mrb[0].mxu0 %v43
    %v344 = vpop.f32.mrb[0].mxu0
    %v345 = vadd.f32 %v83, %v344
    %v346 = vpop.f32.mrb[0].mxu0
    %v347 = vadd.f32 %v87, %v346
    %v348 = vpop.f32.mrb[0].mxu0
    %v349 = vadd.f32 %v83, %v348
    %v350 = vpop.f32.mrb[0].mxu0
    %v351 = vadd.f32 %v87, %v350
    %352 = vmatprep.mubr.bf16.mxu0 0
    %353 = vmatmul.mubr.bf16.gmra.mrb[0].mxu0 %v44
    %v354 = vpop.f32.mrb[0].mxu0
    %v355 = vadd.f32 %v83, %v354
    %v356 = vpop.f32.mrb[0].mxu0
    %v357 = vadd.f32 %v87, %v356
    %v358 = vpop.f32.mrb[0].mxu0
    %v359 = vadd.f32 %v83, %v358
    %v360 = vpop.f32.mrb[0].mxu0
    %v361 = vadd.f32 %v87, %v360
    %362 = vmatprep.mubr.bf16.mxu0 0
    %363 = vmatmul.mubr.bf16.gmra.mrb[0].mxu0 %v45
    %v364 = vpop.f32.mrb[0].mxu0
    %v365 = vadd.f32 %v83, %v364
    %v366 = vpop.f32.mrb[0].mxu0
    %v367 = vadd.f32 %v87, %v366
    %v368 = vpop.f32.mrb[0].mxu0
    %v369 = vadd.f32 %v83, %v368
    %v370 = vpop.f32.mrb[0].mxu0
    %v371 = vadd.f32 %v87, %v370
    %372 = vdwg.mxu0
    %373 = vmatprep.subr.bf16.mxu0 %v199
    %374 = vmatpush1.bf16.msra.mxu0 %v198
    %375 = vmatprep.subr.bf16.mxu0 %v203
    %376 = vmatpush1.bf16.msra.mxu0 %v202
    %377 = vmatprep.subr.bf16.mxu0 %v207
    %378 = vmatpush1.bf16.msra.mxu0 %v206
    %379 = vmatprep.subr.bf16.mxu0 %v211
    %380 = vmatpush1.bf16.msra.mxu0 %v210
    %381 = vmatprep.subr.bf16.mxu0 %v215
    %382 = vmatpush1.bf16.msra.mxu0 %v214
    %383 = vmatprep.subr.bf16.mxu0 %v219
    %384 = vmatpush1.bf16.msra.mxu0 %v218
    %385 = vmatprep.subr.bf16.mxu0 %v223
    %386 = vmatpush1.bf16.msra.mxu0 %v222
    %387 = vmatprep.subr.bf16.mxu0 %v227
    %388 = vmatpush1.bf16.msra.mxu0 %v226
    %389 = vmatprep.subr.bf16.mxu0 0
    %390 = vmatpush1.bf16.msra.mxu0 0
    %391 = vmatprep.subr.bf16.mxu0 0
    %392 = vmatpush1.bf16.msra.mxu0 0
    %393 = vmatprep.subr.bf16.mxu0 0
    %394 = vmatpush1.bf16.msra.mxu0 0
    %395 = vmatprep.subr.bf16.mxu0 0
    %396 = vmatpush1.bf16.msra.mxu0 0
    %397 = vmatprep.subr.bf16.mxu0 0
    %398 = vmatpush1.bf16.msra.mxu0 0
    %399 = vmatprep.subr.bf16.mxu0 0
    %400 = vmatpush1.bf16.msra.mxu0 0
    %401 = vmatprep.subr.bf16.mxu0 0
    %402 = vmatpush1.bf16.msra.mxu0 0
    %403 = vmatprep.subr.bf16.mxu0 0
    %404 = vmatpush1.bf16.msra.mxu0 0
    %405 = vmatprep.mubr.bf16.mxu0 0
    %406 = vmatmul.mubr.bf16.gmra.mrb[0].mxu0 %v38
    %v407 = vpop.f32.mrb[0].mxu0
    %v408 = vadd.f32 %v91, %v407
    %v409 = vpop.f32.mrb[0].mxu0
    %v410 = vadd.f32 %v95, %v409
    %v411 = vpop.f32.mrb[0].mxu0
    %v412 = vadd.f32 %v91, %v411
    %v413 = vpop.f32.mrb[0].mxu0
    %v414 = vadd.f32 %v95, %v413
    %415 = vmatprep.mubr.bf16.mxu0 0
    %416 = vmatmul.mubr.bf16.gmra.mrb[0].mxu0 %v39
    %v417 = vpop.f32.mrb[0].mxu0
    %v418 = vadd.f32 %v91, %v417
    %v419 = vpop.f32.mrb[0].mxu0
    %v420 = vadd.f32 %v95, %v419
    %v421 = vpop.f32.mrb[0].mxu0
    %v422 = vadd.f32 %v91, %v421
    %v423 = vpop.f32.mrb[0].mxu0
    %v424 = vadd.f32 %v95, %v423
    %425 = vmatprep.mubr.bf16.mxu0 0
    %426 = vmatmul.mubr.bf16.gmra.mrb[0].mxu0 %v40
    %v427 = vpop.f32.mrb[0].mxu0
    %v428 = vadd.f32 %v91, %v427
    %v429 = vpop.f32.mrb[0].mxu0
    %v430 = vadd.f32 %v95, %v429
    %v431 = vpop.f32.mrb[0].mxu0
    %v432 = vadd.f32 %v91, %v431
    %v433 = vpop.f32.mrb[0].mxu0
    %v434 = vadd.f32 %v95, %v433
    %435 = vmatprep.mubr.bf16.mxu0 0
    %436 = vmatmul.mubr.bf16.gmra.mrb[0].mxu0 %v41
    %v437 = vpop.f32.mrb[0].mxu0
    %v438 = vadd.f32 %v91, %v437
    %v439 = vpop.f32.mrb[0].mxu0
    %v440 = vadd.f32 %v95, %v439
    %v441 = vpop.f32.mrb[0].mxu0
    %v442 = vadd.f32 %v91, %v441
    %v443 = vpop.f32.mrb[0].mxu0
    %v444 = vadd.f32 %v95, %v443
    %445 = vmatprep.mubr.bf16.mxu0 0
    %446 = vmatmul.mubr.bf16.gmra.mrb[0].mxu0 %v42
    %v447 = vpop.f32.mrb[0].mxu0
    %v448 = vadd.f32 %v91, %v447
    %v449 = vpop.f32.mrb[0].mxu0
    %v450 = vadd.f32 %v95, %v449
    %v451 = vpop.f32.mrb[0].mxu0
    %v452 = vadd.f32 %v91, %v451
    %v453 = vpop.f32.mrb[0].mxu0
    %v454 = vadd.f32 %v95, %v453
    %455 = vmatprep.mubr.bf16.mxu0 0
    %456 = vmatmul.mubr.bf16.gmra.mrb[0].mxu0 %v43
    %v457 = vpop.f32.mrb[0].mxu0
    %v458 = vadd.f32 %v91, %v457
    %v459 = vpop.f32.mrb[0].mxu0
    %v460 = vadd.f32 %v95, %v459
    %v461 = vpop.f32.mrb[0].mxu0
    %v462 = vadd.f32 %v91, %v461
    %v463 = vpop.f32.mrb[0].mxu0
    %v464 = vadd.f32 %v95, %v463
    %465 = vmatprep.mubr.bf16.mxu0 0
    %466 = vmatmul.mubr.bf16.gmra.mrb[0].mxu0 %v44
    %v467 = vpop.f32.mrb[0].mxu0
    %v468 = vadd.f32 %v91, %v467
    %v469 = vpop.f32.mrb[0].mxu0
    %v470 = vadd.f32 %v95, %v469
    %v471 = vpop.f32.mrb[0].mxu0
    %v472 = vadd.f32 %v91, %v471
    %v473 = vpop.f32.mrb[0].mxu0
    %v474 = vadd.f32 %v95, %v473
    %475 = vmatprep.mubr.bf16.mxu0 0
    %476 = vmatmul.mubr.bf16.gmra.mrb[0].mxu0 %v45
    %v477 = vpop.f32.mrb[0].mxu0
    %v478 = vadd.f32 %v91, %v477
    %v479 = vpop.f32.mrb[0].mxu0
    %v480 = vadd.f32 %v95, %v479
    %v481 = vpop.f32.mrb[0].mxu0
    %v482 = vadd.f32 %v91, %v481
    %v483 = vpop.f32.mrb[0].mxu0
    %v484 = vadd.f32 %v95, %v483
    %485 = vdwg.mxu0
    %v486 = vmul.f32 %v295, 0.5
    %v487 = vmul.f32 %v297, 0.5
    %v488 = vmul.f32 %v408, 0.5
    %v489 = vmul.f32 %v410, 0.5
    %v490 = vmul.f32 %v299, 0.5
    %v491 = vmul.f32 %v301, 0.5
    %v492 = vmul.f32 %v412, 0.5
    %v493 = vmul.f32 %v414, 0.5
    %v494 = vmul.f32 %v305, 0.5
    %v495 = vmul.f32 %v307, 0.5
    %v496 = vmul.f32 %v418, 0.5
    %v497 = vmul.f32 %v420, 0.5
    %v498 = vmul.f32 %v309, 0.5
    %v499 = vmul.f32 %v311, 0.5
    %v500 = vmul.f32 %v422, 0.5
    %v501 = vmul.f32 %v424, 0.5
    %v502 = vmul.f32 %v315, 0.5
    %v503 = vmul.f32 %v317, 0.5
    %v504 = vmul.f32 %v428, 0.5
    %v505 = vmul.f32 %v430, 0.5
    %v506 = vmul.f32 %v319, 0.5
    %v507 = vmul.f32 %v321, 0.5
    %v508 = vmul.f32 %v432, 0.5
    %v509 = vmul.f32 %v434, 0.5
    %v510 = vmul.f32 %v325, 0.5
    %v511 = vmul.f32 %v327, 0.5
    %v512 = vmul.f32 %v438, 0.5
    %v513 = vmul.f32 %v440, 0.5
    %v514 = vmul.f32 %v329, 0.5
    %v515 = vmul.f32 %v331, 0.5
    %v516 = vmul.f32 %v442, 0.5
    %v517 = vmul.f32 %v444, 0.5
    %v518 = vmul.f32 %v335, 0.5
    %v519 = vmul.f32 %v337, 0.5
    %v520 = vmul.f32 %v448, 0.5
    %v521 = vmul.f32 %v450, 0.5
    %v522 = vmul.f32 %v339, 0.5
    %v523 = vmul.f32 %v341, 0.5
    %v524 = vmul.f32 %v452, 0.5
    %v525 = vmul.f32 %v454, 0.5
    %v526 = vmul.f32 %v345, 0.5
    %v527 = vmul.f32 %v347, 0.5
    %v528 = vmul.f32 %v458, 0.5
    %v529 = vmul.f32 %v460, 0.5
    %v530 = vmul.f32 %v349, 0.5
    %v531 = vmul.f32 %v351, 0.5
    %v532 = vmul.f32 %v462, 0.5
    %v533 = vmul.f32 %v464, 0.5
    %v534 = vmul.f32 %v355, 0.5
    %v535 = vmul.f32 %v357, 0.5
    %v536 = vmul.f32 %v468, 0.5
    %v537 = vmul.f32 %v470, 0.5
    %v538 = vmul.f32 %v359, 0.5
    %v539 = vmul.f32 %v361, 0.5
    %v540 = vmul.f32 %v472, 0.5
    %v541 = vmul.f32 %v474, 0.5
    %v542 = vmul.f32 %v365, 0.5
    %v543 = vmul.f32 %v367, 0.5
    %v544 = vmul.f32 %v478, 0.5
    %v545 = vmul.f32 %v480, 0.5
    %v546 = vmul.f32 %v369, 0.5
    %v547 = vmul.f32 %v371, 0.5
    %v548 = vmul.f32 %v482, 0.5
    %v549 = vmul.f32 %v484, 0.5
    %v550 = vmul.f32 %v295, 0.70710677
    %v551 = vmul.f32 %v297, 0.70710677
    %v552 = vmul.f32 %v408, 0.70710677
    %v553 = vmul.f32 %v410, 0.70710677
    %v554 = vmul.f32 %v299, 0.70710677
    %v555 = vmul.f32 %v301, 0.70710677
    %v556 = vmul.f32 %v412, 0.70710677
    %v557 = vmul.f32 %v414, 0.70710677
    %v558 = vmul.f32 %v305, 0.70710677
    %v559 = vmul.f32 %v307, 0.70710677
    %v560 = vmul.f32 %v418, 0.70710677
    %v561 = vmul.f32 %v420, 0.70710677
    %v562 = vmul.f32 %v309, 0.70710677
    %v563 = vmul.f32 %v311, 0.70710677
    %v564 = vmul.f32 %v422, 0.70710677
    %v565 = vmul.f32 %v424, 0.70710677
    %v566 = vmul.f32 %v315, 0.70710677
    %v567 = vmul.f32 %v317, 0.70710677
    %v568 = vmul.f32 %v428, 0.70710677
    %v569 = vmul.f32 %v430, 0.70710677
    %v570 = vmul.f32 %v319, 0.70710677
    %v571 = vmul.f32 %v321, 0.70710677
    %v572 = vmul.f32 %v432, 0.70710677
    %v573 = vmul.f32 %v434, 0.70710677
    %v574 = vmul.f32 %v325, 0.70710677
    %v575 = vmul.f32 %v327, 0.70710677
    %v576 = vmul.f32 %v438, 0.70710677
    %v577 = vmul.f32 %v440, 0.70710677
    %v578 = vmul.f32 %v329, 0.70710677
    %v579 = vmul.f32 %v331, 0.70710677
    %v580 = vmul.f32 %v442, 0.70710677
    %v581 = vmul.f32 %v444, 0.70710677
    %v582 = vmul.f32 %v335, 0.70710677
    %v583 = vmul.f32 %v337, 0.70710677
    %v584 = vmul.f32 %v448, 0.70710677
    %v585 = vmul.f32 %v450, 0.70710677
    %v586 = vmul.f32 %v339, 0.70710677
    %v587 = vmul.f32 %v341, 0.70710677
    %v588 = vmul.f32 %v452, 0.70710677
    %v589 = vmul.f32 %v454, 0.70710677
    %v590 = vmul.f32 %v345, 0.70710677
    %v591 = vmul.f32 %v347, 0.70710677
    %v592 = vmul.f32 %v458, 0.70710677
    %v593 = vmul.f32 %v460, 0.70710677
    %v594 = vmul.f32 %v349, 0.70710677
    %v595 = vmul.f32 %v351, 0.70710677
    %v596 = vmul.f32 %v462, 0.70710677
    %v597 = vmul.f32 %v464, 0.70710677
    %v598 = vmul.f32 %v355, 0.70710677
    %v599 = vmul.f32 %v357, 0.70710677
    %v600 = vmul.f32 %v468, 0.70710677
    %v601 = vmul.f32 %v470, 0.70710677
    %v602 = vmul.f32 %v359, 0.70710677
    %v603 = vmul.f32 %v361, 0.70710677
    %v604 = vmul.f32 %v472, 0.70710677
    %v605 = vmul.f32 %v474, 0.70710677
    %v606 = vmul.f32 %v365, 0.70710677
    %v607 = vmul.f32 %v367, 0.70710677
    %v608 = vmul.f32 %v478, 0.70710677
    %v609 = vmul.f32 %v480, 0.70710677
    %v610 = vmul.f32 %v369, 0.70710677
    %v611 = vmul.f32 %v371, 0.70710677
    %v612 = vmul.f32 %v482, 0.70710677
    %v613 = vmul.f32 %v484, 0.70710677
    %v614 = verf.f32.pop %v550
    %v615 = verf.f32.pop %v551
    %v616 = verf.f32.pop %v552
    %v617 = verf.f32.pop %v553
    %v618 = verf.f32.pop %v554
    %v619 = verf.f32.pop %v555
    %v620 = verf.f32.pop %v556
    %v621 = verf.f32.pop %v557
    %v622 = verf.f32.pop %v558
    %v623 = verf.f32.pop %v559
    %v624 = verf.f32.pop %v560
    %v625 = verf.f32.pop %v561
    %v626 = verf.f32.pop %v562
    %v627 = verf.f32.pop %v563
    %v628 = verf.f32.pop %v564
    %v629 = verf.f32.pop %v565
    %v630 = verf.f32.pop %v566
    %v631 = verf.f32.pop %v567
    %v632 = verf.f32.pop %v568
    %v633 = verf.f32.pop %v569
    %v634 = verf.f32.pop %v570
    %v635 = verf.f32.pop %v571
    %v636 = verf.f32.pop %v572
    %v637 = verf.f32.pop %v573
    %v638 = verf.f32.pop %v574
    %v639 = verf.f32.pop %v575
    %v640 = verf.f32.pop %v576
    %v641 = verf.f32.pop %v577
    %v642 = verf.f32.pop %v578
    %v643 = verf.f32.pop %v579
    %v644 = verf.f32.pop %v580
    %v645 = verf.f32.pop %v581
    %v646 = verf.f32.pop %v582
    %v647 = verf.f32.pop %v583
    %v648 = verf.f32.pop %v584
    %v649 = verf.f32.pop %v585
    %v650 = verf.f32.pop %v586
    %v651 = verf.f32.pop %v587
    %v652 = verf.f32.pop %v588
    %v653 = verf.f32.pop %v589
    %v654 = verf.f32.pop %v590
    %v655 = verf.f32.pop %v591
    %v656 = verf.f32.pop %v592
    %v657 = verf.f32.pop %v593
    %v658 = verf.f32.pop %v594
    %v659 = verf.f32.pop %v595
    %v660 = verf.f32.pop %v596
    %v661 = verf.f32.pop %v597
    %v662 = verf.f32.pop %v598
    %v663 = verf.f32.pop %v599
    %v664 = verf.f32.pop %v600
    %v665 = verf.f32.pop %v601
    %v666 = verf.f32.pop %v602
    %v667 = verf.f32.pop %v603
    %v668 = verf.f32.pop %v604
    %v669 = verf.f32.pop %v605
    %v670 = verf.f32.pop %v606
    %v671 = verf.f32.pop %v607
    %v672 = verf.f32.pop %v608
    %v673 = verf.f32.pop %v609
    %v674 = verf.f32.pop %v610
    %v675 = verf.f32.pop %v611
    %v676 = verf.f32.pop %v612
    %v677 = verf.f32.pop %v613
    %v678 = vadd.f32 %v614, 1.0
    %v679 = vadd.f32 %v615, 1.0
    %v680 = vadd.f32 %v616, 1.0
    %v681 = vadd.f32 %v617, 1.0
    %v682 = vadd.f32 %v618, 1.0
    %v683 = vadd.f32 %v619, 1.0
    %v684 = vadd.f32 %v620, 1.0
    %v685 = vadd.f32 %v621, 1.0
    %v686 = vadd.f32 %v622, 1.0
    %v687 = vadd.f32 %v623, 1.0
    %v688 = vadd.f32 %v624, 1.0
    %v689 = vadd.f32 %v625, 1.0
    %v690 = vadd.f32 %v626, 1.0
    %v691 = vadd.f32 %v627, 1.0
    %v692 = vadd.f32 %v628, 1.0
    %v693 = vadd.f32 %v629, 1.0
    %v694 = vadd.f32 %v630, 1.0
    %v695 = vadd.f32 %v631, 1.0
    %v696 = vadd.f32 %v632, 1.0
    %v697 = vadd.f32 %v633, 1.0
    %v698 = vadd.f32 %v634, 1.0
    %v699 = vadd.f32 %v635, 1.0
    %v700 = vadd.f32 %v636, 1.0
    %v701 = vadd.f32 %v637, 1.0
    %v702 = vadd.f32 %v638, 1.0
    %v703 = vadd.f32 %v639, 1.0
    %v704 = vadd.f32 %v640, 1.0
    %v705 = vadd.f32 %v641, 1.0
    %v706 = vadd.f32 %v642, 1.0
    %v707 = vadd.f32 %v643, 1.0
    %v708 = vadd.f32 %v644, 1.0
    %v709 = vadd.f32 %v645, 1.0
    %v710 = vadd.f32 %v646, 1.0
    %v711 = vadd.f32 %v647, 1.0
    %v712 = vadd.f32 %v648, 1.0
    %v713 = vadd.f32 %v649, 1.0
    %v714 = vadd.f32 %v650, 1.0
    %v715 = vadd.f32 %v651, 1.0
    %v716 = vadd.f32 %v652, 1.0
    %v717 = vadd.f32 %v653, 1.0
    %v718 = vadd.f32 %v654, 1.0
    %v719 = vadd.f32 %v655, 1.0
    %v720 = vadd.f32 %v656, 1.0
    %v721 = vadd.f32 %v657, 1.0
    %v722 = vadd.f32 %v658, 1.0
    %v723 = vadd.f32 %v659, 1.0
    %v724 = vadd.f32 %v660, 1.0
    %v725 = vadd.f32 %v661, 1.0
    %v726 = vadd.f32 %v662, 1.0
    %v727 = vadd.f32 %v663, 1.0
    %v728 = vadd.f32 %v664, 1.0
    %v729 = vadd.f32 %v665, 1.0
    %v730 = vadd.f32 %v666, 1.0
    %v731 = vadd.f32 %v667, 1.0
    %v732 = vadd.f32 %v668, 1.0
    %v733 = vadd.f32 %v669, 1.0
    %v734 = vadd.f32 %v670, 1.0
    %v735 = vadd.f32 %v671, 1.0
    %v736 = vadd.f32 %v672, 1.0
    %v737 = vadd.f32 %v673, 1.0
    %v738 = vadd.f32 %v674, 1.0
    %v739 = vadd.f32 %v675, 1.0
    %v740 = vadd.f32 %v676, 1.0
    %v741 = vadd.f32 %v677, 1.0
    %v742 = vmul.f32 %v486, %v678
    %v743 = vmul.f32 %v487, %v679
    %v744 = vmul.f32 %v488, %v680
    %v745 = vmul.f32 %v489, %v681
    %v746 = vmul.f32 %v490, %v682
    %v747 = vmul.f32 %v491, %v683
    %v748 = vmul.f32 %v492, %v684
    %v749 = vmul.f32 %v493, %v685
    %v750 = vmul.f32 %v494, %v686
    %v751 = vmul.f32 %v495, %v687
    %v752 = vmul.f32 %v496, %v688
    %v753 = vmul.f32 %v497, %v689
    %v754 = vmul.f32 %v498, %v690
    %v755 = vmul.f32 %v499, %v691
    %v756 = vmul.f32 %v500, %v692
    %v757 = vmul.f32 %v501, %v693
    %v758 = vmul.f32 %v502, %v694
    %v759 = vmul.f32 %v503, %v695
    %v760 = vmul.f32 %v504, %v696
    %v761 = vmul.f32 %v505, %v697
    %v762 = vmul.f32 %v506, %v698
    %v763 = vmul.f32 %v507, %v699
    %v764 = vmul.f32 %v508, %v700
    %v765 = vmul.f32 %v509, %v701
    %v766 = vmul.f32 %v510, %v702
    %v767 = vmul.f32 %v511, %v703
    %v768 = vmul.f32 %v512, %v704
    %v769 = vmul.f32 %v513, %v705
    %v770 = vmul.f32 %v514, %v706
    %v771 = vmul.f32 %v515, %v707
    %v772 = vmul.f32 %v516, %v708
    %v773 = vmul.f32 %v517, %v709
    %v774 = vmul.f32 %v518, %v710
    %v775 = vmul.f32 %v519, %v711
    %v776 = vmul.f32 %v520, %v712
    %v777 = vmul.f32 %v521, %v713
    %v778 = vmul.f32 %v522, %v714
    %v779 = vmul.f32 %v523, %v715
    %v780 = vmul.f32 %v524, %v716
    %v781 = vmul.f32 %v525, %v717
    %v782 = vmul.f32 %v526, %v718
    %v783 = vmul.f32 %v527, %v719
    %v784 = vmul.f32 %v528, %v720
    %v785 = vmul.f32 %v529, %v721
    %v786 = vmul.f32 %v530, %v722
    %v787 = vmul.f32 %v531, %v723
    %v788 = vmul.f32 %v532, %v724
    %v789 = vmul.f32 %v533, %v725
    %v790 = vmul.f32 %v534, %v726
    %v791 = vmul.f32 %v535, %v727
    %v792 = vmul.f32 %v536, %v728
    %v793 = vmul.f32 %v537, %v729
    %v794 = vmul.f32 %v538, %v730
    %v795 = vmul.f32 %v539, %v731
    %v796 = vmul.f32 %v540, %v732
    %v797 = vmul.f32 %v541, %v733
    %v798 = vmul.f32 %v542, %v734
    %v799 = vmul.f32 %v543, %v735
    %v800 = vmul.f32 %v544, %v736
    %v801 = vmul.f32 %v545, %v737
    %v802 = vmul.f32 %v546, %v738
    %v803 = vmul.f32 %v547, %v739
    %v804 = vmul.f32 %v548, %v740
    %v805 = vmul.f32 %v549, %v741
    %v806 = vpack.c.bf16 %v746, %v742
    %v807 = vpack.c.bf16 %v747, %v743
    %v808 = vpack.c.bf16 %v748, %v744
    %v809 = vpack.c.bf16 %v749, %v745
    %v810 = vpack.c.bf16 %v754, %v750
    %v811 = vpack.c.bf16 %v755, %v751
    %v812 = vpack.c.bf16 %v756, %v752
    %v813 = vpack.c.bf16 %v757, %v753
    %v814 = vpack.c.bf16 %v762, %v758
    %v815 = vpack.c.bf16 %v763, %v759
    %v816 = vpack.c.bf16 %v764, %v760
    %v817 = vpack.c.bf16 %v765, %v761
    %v818 = vpack.c.bf16 %v770, %v766
    %v819 = vpack.c.bf16 %v771, %v767
    %v820 = vpack.c.bf16 %v772, %v768
    %v821 = vpack.c.bf16 %v773, %v769
    %v822 = vpack.c.bf16 %v778, %v774
    %v823 = vpack.c.bf16 %v779, %v775
    %v824 = vpack.c.bf16 %v780, %v776
    %v825 = vpack.c.bf16 %v781, %v777
    %v826 = vpack.c.bf16 %v786, %v782
    %v827 = vpack.c.bf16 %v787, %v783
    %v828 = vpack.c.bf16 %v788, %v784
    %v829 = vpack.c.bf16 %v789, %v785
    %v830 = vpack.c.bf16 %v794, %v790
    %v831 = vpack.c.bf16 %v795, %v791
    %v832 = vpack.c.bf16 %v796, %v792
    %v833 = vpack.c.bf16 %v797, %v793
    %v834 = vpack.c.bf16 %v802, %v798
    %v835 = vpack.c.bf16 %v803, %v799
    %v836 = vpack.c.bf16 %v804, %v800
    %v837 = vpack.c.bf16 %v805, %v801
    %v838 = vld [vmem:[%s3] sm:$0xf]
    %v839 = vld [vmem:[%s3 + $0x4] sm:$0xf]
    %v840 = vld [vmem:[%s3 + $0x8] sm:$0xf]
    %v841 = vld [vmem:[%s3 + $0xc] sm:$0xf]
    %v842 = vld [vmem:[%s3 + $0x10] sm:$0xf]
    %v843 = vld [vmem:[%s3 + $0x14] sm:$0xf]
    %v844 = vld [vmem:[%s3 + $0x18] sm:$0xf]
    %v845 = vld [vmem:[%s3 + $0x1c] sm:$0xf]
    %v846 = vld [vmem:[%s3 + $0x20] sm:$0xf]
    %v847 = vld [vmem:[%s3 + $0x24] sm:$0xf]
    %v848 = vld [vmem:[%s3 + $0x28] sm:$0xf]
    %v849 = vld [vmem:[%s3 + $0x2c] sm:$0xf]
    %v850 = vld [vmem:[%s3 + $0x30] sm:$0xf]
    %v851 = vld [vmem:[%s3 + $0x34] sm:$0xf]
    %v852 = vld [vmem:[%s3 + $0x38] sm:$0xf]
    %v853 = vld [vmem:[%s3 + $0x3c] sm:$0xf]
    %v854 = vld [vmem:[%s3 + $0x40] sm:$0xf]
    %v855 = vld [vmem:[%s3 + $0x44] sm:$0xf]
    %v856 = vld [vmem:[%s3 + $0x48] sm:$0xf]
    %v857 = vld [vmem:[%s3 + $0x4c] sm:$0xf]
    %v858 = vld [vmem:[%s3 + $0x50] sm:$0xf]
    %v859 = vld [vmem:[%s3 + $0x54] sm:$0xf]
    %v860 = vld [vmem:[%s3 + $0x58] sm:$0xf]
    %v861 = vld [vmem:[%s3 + $0x5c] sm:$0xf]
    %v862 = vld [vmem:[%s3 + $0x60] sm:$0xf]
    %v863 = vld [vmem:[%s3 + $0x64] sm:$0xf]
    %v864 = vld [vmem:[%s3 + $0x68] sm:$0xf]
    %v865 = vld [vmem:[%s3 + $0x6c] sm:$0xf]
    %v866 = vld [vmem:[%s3 + $0x70] sm:$0xf]
    %v867 = vld [vmem:[%s3 + $0x74] sm:$0xf]
    %v868 = vld [vmem:[%s3 + $0x78] sm:$0xf]
    %v869 = vld [vmem:[%s3 + $0x7c] sm:$0xf]
    %v870 = vld [vmem:[%s3 + $0x80] sm:$0xf]
    %v871 = vld [vmem:[%s3 + $0x84] sm:$0xf]
    %v872 = vld [vmem:[%s3 + $0x88] sm:$0xf]
    %v873 = vld [vmem:[%s3 + $0x8c] sm:$0xf]
    %v874 = vld [vmem:[%s3 + $0x90] sm:$0xf]
    %v875 = vld [vmem:[%s3 + $0x94] sm:$0xf]
    %v876 = vld [vmem:[%s3 + $0x98] sm:$0xf]
    %v877 = vld [vmem:[%s3 + $0x9c] sm:$0xf]
    %v878 = vld [vmem:[%s3 + $0xa0] sm:$0xf]
    %v879 = vld [vmem:[%s3 + $0xa4] sm:$0xf]
    %v880 = vld [vmem:[%s3 + $0xa8] sm:$0xf]
    %v881 = vld [vmem:[%s3 + $0xac] sm:$0xf]
    %v882 = vld [vmem:[%s3 + $0xb0] sm:$0xf]
    %v883 = vld [vmem:[%s3 + $0xb4] sm:$0xf]
    %v884 = vld [vmem:[%s3 + $0xb8] sm:$0xf]
    %v885 = vld [vmem:[%s3 + $0xbc] sm:$0xf]
    %v886 = vld [vmem:[%s3 + $0xc0] sm:$0xf]
    %v887 = vld [vmem:[%s3 + $0xc4] sm:$0xf]
    %v888 = vld [vmem:[%s3 + $0xc8] sm:$0xf]
    %v889 = vld [vmem:[%s3 + $0xcc] sm:$0xf]
    %v890 = vld [vmem:[%s3 + $0xd0] sm:$0xf]
    %v891 = vld [vmem:[%s3 + $0xd4] sm:$0xf]
    %v892 = vld [vmem:[%s3 + $0xd8] sm:$0xf]
    %v893 = vld [vmem:[%s3 + $0xdc] sm:$0xf]
    %v894 = vld [vmem:[%s3 + $0xe0] sm:$0xf]
    %v895 = vld [vmem:[%s3 + $0xe4] sm:$0xf]
    %v896 = vld [vmem:[%s3 + $0xe8] sm:$0xf]
    %v897 = vld [vmem:[%s3 + $0xec] sm:$0xf]
    %v898 = vld [vmem:[%s3 + $0xf0] sm:$0xf]
    %v899 = vld [vmem:[%s3 + $0xf4] sm:$0xf]
    %v900 = vld [vmem:[%s3 + $0xf8] sm:$0xf]
    %v901 = vld [vmem:[%s3 + $0xfc] sm:$0xf]
    %v902 = vld [vmem:[%s4] sm:$0x1]
    %v904 = vlaneseq
    %v905 = vshrl.u32 %v904, 7
    %v906 = vsub.s32 0, %v905
    %v907 = vrot.slane %v902, %v906
    %v973 = vunpack.c.l.b16 %v838
    %v974 = vunpack.c.l.b16 %v839
    %v975 = vunpack.c.l.b16 %v840
    %v976 = vunpack.c.l.b16 %v841
    %v977 = vunpack.c.l.b16 %v842
    %v978 = vunpack.c.l.b16 %v843
    %v979 = vunpack.c.l.b16 %v844
    %v980 = vunpack.c.l.b16 %v845
    %v981 = vunpack.c.l.b16 %v846
    %v982 = vunpack.c.l.b16 %v847
    %v983 = vunpack.c.l.b16 %v848
    %v984 = vunpack.c.l.b16 %v849
    %v985 = vunpack.c.l.b16 %v850
    %v986 = vunpack.c.l.b16 %v851
    %v987 = vunpack.c.l.b16 %v852
    %v988 = vunpack.c.l.b16 %v853
    %v989 = vunpack.c.l.b16 %v854
    %v990 = vunpack.c.l.b16 %v855
    %v991 = vunpack.c.l.b16 %v856
    %v992 = vunpack.c.l.b16 %v857
    %v993 = vunpack.c.l.b16 %v858
    %v994 = vunpack.c.l.b16 %v859
    %v995 = vunpack.c.l.b16 %v860
    %v996 = vunpack.c.l.b16 %v861
    %v997 = vunpack.c.l.b16 %v862
    %v998 = vunpack.c.l.b16 %v863
    %v999 = vunpack.c.l.b16 %v864
    %v1000 = vunpack.c.l.b16 %v865
    %v1001 = vunpack.c.l.b16 %v866
    %v1002 = vunpack.c.l.b16 %v867
    %v1003 = vunpack.c.l.b16 %v868
    %v1004 = vunpack.c.l.b16 %v869
    %v1005 = vunpack.c.l.b16 %v870
    %v1006 = vunpack.c.l.b16 %v871
    %v1007 = vunpack.c.l.b16 %v872
    %v1008 = vunpack.c.l.b16 %v873
    %v1009 = vunpack.c.l.b16 %v874
    %v1010 = vunpack.c.l.b16 %v875
    %v1011 = vunpack.c.l.b16 %v876
    %v1012 = vunpack.c.l.b16 %v877
    %v1013 = vunpack.c.l.b16 %v878
    %v1014 = vunpack.c.l.b16 %v879
    %v1015 = vunpack.c.l.b16 %v880
    %v1016 = vunpack.c.l.b16 %v881
    %v1017 = vunpack.c.l.b16 %v882
    %v1018 = vunpack.c.l.b16 %v883
    %v1019 = vunpack.c.l.b16 %v884
    %v1020 = vunpack.c.l.b16 %v885
    %v1021 = vunpack.c.l.b16 %v886
    %v1022 = vunpack.c.l.b16 %v887
    %v1023 = vunpack.c.l.b16 %v888
    %v1024 = vunpack.c.l.b16 %v889
    %v1025 = vunpack.c.l.b16 %v890
    %v1026 = vunpack.c.l.b16 %v891
    %v1027 = vunpack.c.l.b16 %v892
    %v1028 = vunpack.c.l.b16 %v893
    %v1029 = vunpack.c.l.b16 %v894
    %v1030 = vunpack.c.l.b16 %v895
    %v1031 = vunpack.c.l.b16 %v896
    %v1032 = vunpack.c.l.b16 %v897
    %v1033 = vunpack.c.l.b16 %v898
    %v1034 = vunpack.c.l.b16 %v899
    %v1035 = vunpack.c.l.b16 %v900
    %v1036 = vunpack.c.l.b16 %v901
    %v1037 = vpack.c.b16 %v974, %v973
    %v1038 = vpack.c.b16 %v976, %v975
    %v1039 = vpack.c.b16 %v978, %v977
    %v1040 = vpack.c.b16 %v980, %v979
    %v1041 = vpack.c.b16 %v982, %v981
    %v1042 = vpack.c.b16 %v984, %v983
    %v1043 = vpack.c.b16 %v986, %v985
    %v1044 = vpack.c.b16 %v988, %v987
    %v1045 = vpack.c.b16 %v990, %v989
    %v1046 = vpack.c.b16 %v992, %v991
    %v1047 = vpack.c.b16 %v994, %v993
    %v1048 = vpack.c.b16 %v996, %v995
    %v1049 = vpack.c.b16 %v998, %v997
    %v1050 = vpack.c.b16 %v1000, %v999
    %v1051 = vpack.c.b16 %v1002, %v1001
    %v1052 = vpack.c.b16 %v1004, %v1003
    %v1053 = vpack.c.b16 %v1006, %v1005
    %v1054 = vpack.c.b16 %v1008, %v1007
    %v1055 = vpack.c.b16 %v1010, %v1009
    %v1056 = vpack.c.b16 %v1012, %v1011
    %v1057 = vpack.c.b16 %v1014, %v1013
    %v1058 = vpack.c.b16 %v1016, %v1015
    %v1059 = vpack.c.b16 %v1018, %v1017
    %v1060 = vpack.c.b16 %v1020, %v1019
    %v1061 = vpack.c.b16 %v1022, %v1021
    %v1062 = vpack.c.b16 %v1024, %v1023
    %v1063 = vpack.c.b16 %v1026, %v1025
    %v1064 = vpack.c.b16 %v1028, %v1027
    %v1065 = vpack.c.b16 %v1030, %v1029
    %v1066 = vpack.c.b16 %v1032, %v1031
    %v1067 = vpack.c.b16 %v1034, %v1033
    %v1068 = vpack.c.b16 %v1036, %v1035
    %1101 = vmatprep.subr.bf16.mxu0 0
    %1102 = vmatpush1.bf16.msra.mxu0 %v1037
    %1103 = vmatprep.subr.bf16.mxu0 0
    %1104 = vmatpush1.bf16.msra.mxu0 %v1038
    %1105 = vmatprep.subr.bf16.mxu0 0
    %1106 = vmatpush1.bf16.msra.mxu0 %v1039
    %1107 = vmatprep.subr.bf16.mxu0 0
    %1108 = vmatpush1.bf16.msra.mxu0 %v1040
    %1109 = vmatprep.subr.bf16.mxu0 0
    %1110 = vmatpush1.bf16.msra.mxu0 %v1041
    %1111 = vmatprep.subr.bf16.mxu0 0
    %1112 = vmatpush1.bf16.msra.mxu0 %v1042
    %1113 = vmatprep.subr.bf16.mxu0 0
    %1114 = vmatpush1.bf16.msra.mxu0 %v1043
    %1115 = vmatprep.subr.bf16.mxu0 0
    %1116 = vmatpush1.bf16.msra.mxu0 %v1044
    %1117 = vmatprep.subr.bf16.mxu0 0
    %1118 = vmatpush1.bf16.msra.mxu0 %v1045
    %1119 = vmatprep.subr.bf16.mxu0 0
    %1120 = vmatpush1.bf16.msra.mxu0 %v1046
    %1121 = vmatprep.subr.bf16.mxu0 0
    %1122 = vmatpush1.bf16.msra.mxu0 %v1047
    %1123 = vmatprep.subr.bf16.mxu0 0
    %1124 = vmatpush1.bf16.msra.mxu0 %v1048
    %1125 = vmatprep.subr.bf16.mxu0 0
    %1126 = vmatpush1.bf16.msra.mxu0 %v1049
    %1127 = vmatprep.subr.bf16.mxu0 0
    %1128 = vmatpush1.bf16.msra.mxu0 %v1050
    %1129 = vmatprep.subr.bf16.mxu0 0
    %1130 = vmatpush1.bf16.msra.mxu0 %v1051
    %1131 = vmatprep.subr.bf16.mxu0 0
    %1132 = vmatpush1.bf16.msra.mxu0 %v1052
    %1133 = vmatprep.mubr.bf16.mxu0 %v807
    %1134 = vmatmul.mubr.bf16.gmra.mrb[0].mxu0 %v806
    %v1135 = vpop.f32.mrb[0].mxu0
    %v1136 = vadd.f32 %v907, %v1135
    %v1137 = vpop.f32.mrb[0].mxu0
    %v1138 = vpop.f32.mrb[0].mxu0
    %v1139 = vadd.f32 %v907, %v1138
    %v1140 = vpop.f32.mrb[0].mxu0
    %1141 = vmatprep.mubr.bf16.mxu0 %v811
    %1142 = vmatmul.mubr.bf16.gmra.mrb[0].mxu0 %v810
    %v1143 = vpop.f32.mrb[0].mxu0
    %v1144 = vadd.f32 %v907, %v1143
    %v1145 = vpop.f32.mrb[0].mxu0
    %v1146 = vpop.f32.mrb[0].mxu0
    %v1147 = vadd.f32 %v907, %v1146
    %v1148 = vpop.f32.mrb[0].mxu0
    %1149 = vmatprep.mubr.bf16.mxu0 %v815
    %1150 = vmatmul.mubr.bf16.gmra.mrb[0].mxu0 %v814
    %v1151 = vpop.f32.mrb[0].mxu0
    %v1152 = vadd.f32 %v907, %v1151
    %v1153 = vpop.f32.mrb[0].mxu0
    %v1154 = vpop.f32.mrb[0].mxu0
    %v1155 = vadd.f32 %v907, %v1154
    %v1156 = vpop.f32.mrb[0].mxu0
    %1157 = vmatprep.mubr.bf16.mxu0 %v819
    %1158 = vmatmul.mubr.bf16.gmra.mrb[0].mxu0 %v818
    %v1159 = vpop.f32.mrb[0].mxu0
    %v1160 = vadd.f32 %v907, %v1159
    %v1161 = vpop.f32.mrb[0].mxu0
    %v1162 = vpop.f32.mrb[0].mxu0
    %v1163 = vadd.f32 %v907, %v1162
    %v1164 = vpop.f32.mrb[0].mxu0
    %1165 = vmatprep.mubr.bf16.mxu0 %v823
    %1166 = vmatmul.mubr.bf16.gmra.mrb[0].mxu0 %v822
    %v1167 = vpop.f32.mrb[0].mxu0
    %v1168 = vadd.f32 %v907, %v1167
    %v1169 = vpop.f32.mrb[0].mxu0
    %v1170 = vpop.f32.mrb[0].mxu0
    %v1171 = vadd.f32 %v907, %v1170
    %v1172 = vpop.f32.mrb[0].mxu0
    %1173 = vmatprep.mubr.bf16.mxu0 %v827
    %1174 = vmatmul.mubr.bf16.gmra.mrb[0].mxu0 %v826
    %v1175 = vpop.f32.mrb[0].mxu0
    %v1176 = vadd.f32 %v907, %v1175
    %v1177 = vpop.f32.mrb[0].mxu0
    %v1178 = vpop.f32.mrb[0].mxu0
    %v1179 = vadd.f32 %v907, %v1178
    %v1180 = vpop.f32.mrb[0].mxu0
    %1181 = vmatprep.mubr.bf16.mxu0 %v831
    %1182 = vmatmul.mubr.bf16.gmra.mrb[0].mxu0 %v830
    %v1183 = vpop.f32.mrb[0].mxu0
    %v1184 = vadd.f32 %v907, %v1183
    %v1185 = vpop.f32.mrb[0].mxu0
    %v1186 = vpop.f32.mrb[0].mxu0
    %v1187 = vadd.f32 %v907, %v1186
    %v1188 = vpop.f32.mrb[0].mxu0
    %1189 = vmatprep.mubr.bf16.mxu0 %v835
    %1190 = vmatmul.mubr.bf16.gmra.mrb[0].mxu0 %v834
    %v1191 = vpop.f32.mrb[0].mxu0
    %v1192 = vadd.f32 %v907, %v1191
    %v1193 = vpop.f32.mrb[0].mxu0
    %v1194 = vpop.f32.mrb[0].mxu0
    %v1195 = vadd.f32 %v907, %v1194
    %v1196 = vpop.f32.mrb[0].mxu0
    %1197 = vdwg.mxu0
    %1198 = vmatprep.subr.bf16.mxu0 0
    %1199 = vmatpush1.bf16.msra.mxu0 %v1053
    %1200 = vmatprep.subr.bf16.mxu0 0
    %1201 = vmatpush1.bf16.msra.mxu0 %v1054
    %1202 = vmatprep.subr.bf16.mxu0 0
    %1203 = vmatpush1.bf16.msra.mxu0 %v1055
    %1204 = vmatprep.subr.bf16.mxu0 0
    %1205 = vmatpush1.bf16.msra.mxu0 %v1056
    %1206 = vmatprep.subr.bf16.mxu0 0
    %1207 = vmatpush1.bf16.msra.mxu0 %v1057
    %1208 = vmatprep.subr.bf16.mxu0 0
    %1209 = vmatpush1.bf16.msra.mxu0 %v1058
    %1210 = vmatprep.subr.bf16.mxu0 0
    %1211 = vmatpush1.bf16.msra.mxu0 %v1059
    %1212 = vmatprep.subr.bf16.mxu0 0
    %1213 = vmatpush1.bf16.msra.mxu0 %v1060
    %1214 = vmatprep.subr.bf16.mxu0 0
    %1215 = vmatpush1.bf16.msra.mxu0 %v1061
    %1216 = vmatprep.subr.bf16.mxu0 0
    %1217 = vmatpush1.bf16.msra.mxu0 %v1062
    %1218 = vmatprep.subr.bf16.mxu0 0
    %1219 = vmatpush1.bf16.msra.mxu0 %v1063
    %1220 = vmatprep.subr.bf16.mxu0 0
    %1221 = vmatpush1.bf16.msra.mxu0 %v1064
    %1222 = vmatprep.subr.bf16.mxu0 0
    %1223 = vmatpush1.bf16.msra.mxu0 %v1065
    %1224 = vmatprep.subr.bf16.mxu0 0
    %1225 = vmatpush1.bf16.msra.mxu0 %v1066
    %1226 = vmatprep.subr.bf16.mxu0 0
    %1227 = vmatpush1.bf16.msra.mxu0 %v1067
    %1228 = vmatprep.subr.bf16.mxu0 0
    %1229 = vmatpush1.bf16.msra.mxu0 %v1068
    %1230 = vmatprep.mubr.bf16.mxu0 %v809
    %1231 = vmatmul.mubr.bf16.gmra.mrb[0].mxu0 %v808
    %v1232 = vpop.f32.mrb[0].mxu0
    %v1233 = vadd.f32 %v1136, %v1232
    %v1234 = vpop.f32.mrb[0].mxu0
    %v1235 = vpop.f32.mrb[0].mxu0
    %v1236 = vadd.f32 %v1139, %v1235
    %v1237 = vpop.f32.mrb[0].mxu0
    %1238 = vmatprep.mubr.bf16.mxu0 %v813
    %1239 = vmatmul.mubr.bf16.gmra.mrb[0].mxu0 %v812
    %v1240 = vpop.f32.mrb[0].mxu0
    %v1241 = vadd.f32 %v1144, %v1240
    %v1242 = vpop.f32.mrb[0].mxu0
    %v1243 = vpop.f32.mrb[0].mxu0
    %v1244 = vadd.f32 %v1147, %v1243
    %v1245 = vpop.f32.mrb[0].mxu0
    %1246 = vmatprep.mubr.bf16.mxu0 %v817
    %1247 = vmatmul.mubr.bf16.gmra.mrb[0].mxu0 %v816
    %v1248 = vpop.f32.mrb[0].mxu0
    %v1249 = vadd.f32 %v1152, %v1248
    %v1250 = vpop.f32.mrb[0].mxu0
    %v1251 = vpop.f32.mrb[0].mxu0
    %v1252 = vadd.f32 %v1155, %v1251
    %v1253 = vpop.f32.mrb[0].mxu0
    %1254 = vmatprep.mubr.bf16.mxu0 %v821
    %1255 = vmatmul.mubr.bf16.gmra.mrb[0].mxu0 %v820
    %v1256 = vpop.f32.mrb[0].mxu0
    %v1257 = vadd.f32 %v1160, %v1256
    %v1258 = vpop.f32.mrb[0].mxu0
    %v1259 = vpop.f32.mrb[0].mxu0
    %v1260 = vadd.f32 %v1163, %v1259
    %v1261 = vpop.f32.mrb[0].mxu0
    %1262 = vmatprep.mubr.bf16.mxu0 %v825
    %1263 = vmatmul.mubr.bf16.gmra.mrb[0].mxu0 %v824
    %v1264 = vpop.f32.mrb[0].mxu0
    %v1265 = vadd.f32 %v1168, %v1264
    %v1266 = vpop.f32.mrb[0].mxu0
    %v1267 = vpop.f32.mrb[0].mxu0
    %v1268 = vadd.f32 %v1171, %v1267
    %v1269 = vpop.f32.mrb[0].mxu0
    %1270 = vmatprep.mubr.bf16.mxu0 %v829
    %1271 = vmatmul.mubr.bf16.gmra.mrb[0].mxu0 %v828
    %v1272 = vpop.f32.mrb[0].mxu0
    %v1273 = vadd.f32 %v1176, %v1272
    %v1274 = vpop.f32.mrb[0].mxu0
    %v1275 = vpop.f32.mrb[0].mxu0
    %v1276 = vadd.f32 %v1179, %v1275
    %v1277 = vpop.f32.mrb[0].mxu0
    %1278 = vmatprep.mubr.bf16.mxu0 %v833
    %1279 = vmatmul.mubr.bf16.gmra.mrb[0].mxu0 %v832
    %v1280 = vpop.f32.mrb[0].mxu0
    %v1281 = vadd.f32 %v1184, %v1280
    %v1282 = vpop.f32.mrb[0].mxu0
    %v1283 = vpop.f32.mrb[0].mxu0
    %v1284 = vadd.f32 %v1187, %v1283
    %v1285 = vpop.f32.mrb[0].mxu0
    %1286 = vmatprep.mubr.bf16.mxu0 %v837
    %1287 = vmatmul.mubr.bf16.gmra.mrb[0].mxu0 %v836
    %v1288 = vpop.f32.mrb[0].mxu0
    %v1289 = vadd.f32 %v1192, %v1288
    %v1290 = vpop.f32.mrb[0].mxu0
    %v1291 = vpop.f32.mrb[0].mxu0
    %v1292 = vadd.f32 %v1195, %v1291
    %v1293 = vpop.f32.mrb[0].mxu0
    %1294 = vdwg.mxu0
    %1295 = vst [vmem:[#allocation2] sm:$0xff] %v1233
    %1296 = vst [vmem:[#allocation2 + $0x8] sm:$0xff] %v1236
    %1297 = vst [vmem:[#allocation2 + $0x10] sm:$0xff] %v1241
    %1298 = vst [vmem:[#allocation2 + $0x18] sm:$0xff] %v1244
    %1299 = vst [vmem:[#allocation2 + $0x20] sm:$0xff] %v1249
    %1300 = vst [vmem:[#allocation2 + $0x28] sm:$0xff] %v1252
    %1301 = vst [vmem:[#allocation2 + $0x30] sm:$0xff] %v1257
    %1302 = vst [vmem:[#allocation2 + $0x38] sm:$0xff] %v1260
    %1303 = vst [vmem:[#allocation2 + $0x40] sm:$0xff] %v1265
    %1304 = vst [vmem:[#allocation2 + $0x48] sm:$0xff] %v1268
    %1305 = vst [vmem:[#allocation2 + $0x50] sm:$0xff] %v1273
    %1306 = vst [vmem:[#allocation2 + $0x58] sm:$0xff] %v1276
    %1307 = vst [vmem:[#allocation2 + $0x60] sm:$0xff] %v1281
    %1308 = vst [vmem:[#allocation2 + $0x68] sm:$0xff] %v1284
    %1309 = vst [vmem:[#allocation2 + $0x70] sm:$0xff] %v1289
    %1310 = vst [vmem:[#allocation2 + $0x78] sm:$0xff] %v1292
    // Predicated region
    $region22: #{mlp_pallas.1} parent=1 // pred_check
      _
    $region23: #{mlp_pallas.1} parent=1 // pred_check_branch
      %1312 = sbr.rel (0) target = $region25
    $region24: #{mlp_pallas.1} parent=1 // pred_region
      %s1314 = ssub.s32 2048, 2048
      %1315 = vsyncadd [#allocation3], %s1314
      %s1316 = sshll.u32 [#allocation2], 4
      %s1317 = int_to_ptr.vmem [resolvable:$true] %s1316
      %1322 = dma.vmem_to_hbm [thread:$0]  %s1317, 2048, %s5, [#allocation3], 128, 128, 8
    $region25: #{mlp_pallas.1} parent=1 // pred_fallthru
      _
    // Predicated region
    $region26: #{mlp_pallas.1} parent=1 // pred_check
      _
    $region27: #{mlp_pallas.1} parent=1 // pred_check_branch
      %1324 = sbr.rel (0) target = $region29
    $region28: #{mlp_pallas.1} parent=1 // pred_region
      %1325 = dma.done [#allocation3], 2048
    $region29: #{mlp_pallas.1} parent=1 // pred_fallthru
      _
    %1326 = vsyncpa [#allocation3], 1

</llo_original>
